<compile_context>
chip_gen: v5e
topology: v5e:2x2
jax: 0.10.0
libtpu: 0.0.40
codegen_flags: <defaults>
</compile_context>

<pallas_src>
import jax
import jax.numpy as jnp
from jax.experimental import pallas as pl
from jax.experimental.pallas import tpu as pltpu


def mhap_kernel(x_ref, w1t_ref, b1_ref, vbd_ref, o_ref):
    # x_ref  : (Bb, D, T)  float32   activations, channel-major (natural NCHW)
    # w1t_ref: (R,  D)     bfloat16  per-head attention weights, stacked & transposed
    # b1_ref : (R,  1)     float32   per-head attention biases (column vector)
    # vbd_ref: (NH, R)     float32   block-diagonal per-head score vectors
    # o_ref  : (Bb, NH, D) float32   pooled output (heads concatenated outside)
    w1t = w1t_ref[...]
    b1 = b1_ref[...]
    vbd = vbd_ref[...]
    bb = x_ref.shape[0]

    @pl.loop(0, bb)
    def _(b):
        xb = x_ref[b]                                            # (D, T) f32
        # h^T = tanh(W1^T x + b1): big MXU matmul, bf16 operands, f32 accumulate.
        hT = jnp.dot(w1t, xb.astype(jnp.bfloat16),
                     preferred_element_type=jnp.float32)          # (R, T)
        hT = jnp.tanh(hT + b1)
        # Per-head scores, T on lanes (lane-dense, not an N=1 matmul).
        s = jnp.dot(vbd, hT, preferred_element_type=jnp.float32)  # (NH, T)
        # Lane-major softmax over T.
        s = s - jnp.max(s, axis=-1, keepdims=True)
        e = jnp.exp(s)
        a = e * pl.reciprocal(jnp.sum(e, axis=-1, keepdims=True), approx=True)
        # Weighted sum over T as an MXU contraction (f32 for accuracy; M=NH is tiny):
        #   out[h, d] = sum_t a[h, t] * x[d, t]
        out = jax.lax.dot_general(a, xb, (((1,), (1,)), ((), ())),
                                  preferred_element_type=jnp.float32)  # (NH, D)
        o_ref[b] = out.astype(o_ref.dtype)


def pooling_mhap(x_nchw, w1, b1, v, *, max_block_b=8, x_block_budget=8 << 20):
    """PoolingMHAP.forward: NCHW input -> (B, num_head * input_dim)."""
    B, C, H, W = x_nchw.shape
    D, T = C, H * W
    NH, D2, dr = w1.shape
    assert D2 == D and b1.shape == (NH, dr) and v.shape == (NH, dr)
    R = NH * dr

    # One-off (tiny) parameter prep on host:
    #   W stacked per head, pre-transposed for the T-on-lanes matmul, bf16.
    w1t = jnp.transpose(w1, (0, 2, 1)).reshape(R, D).astype(jnp.bfloat16)   # (R, D)
    b1c = b1.astype(jnp.float32).reshape(R, 1)                              # (R, 1)
    #   Block-diagonal score matrix: vbd[h, g*dr + r] = (h == g) * v[g, r].
    vbd = (jnp.eye(NH, dtype=jnp.float32)[:, :, None]
           * v.astype(jnp.float32)[None, :, :]).reshape(NH, R)              # (NH, R)

    # (B, C, H, W) -> (B, D, T): free reshape, NO transpose.
    x_bdt = x_nchw.reshape(B, D, T)

    # Batch elements per grid step: amortize per-step overhead while
    #  - keeping the double-buffered x block inside a conservative VMEM budget,
    #  - keeping >= 2 grid steps (both v7x TensorCores get work),
    #  - dividing B exactly (no padding copy of x).
    bb = max(1, min(max_block_b, x_block_budget // (2 * D * T * 4)))
    if B >= 2:
        bb = min(bb, B // 2)
    bb = max(1, bb)
    while B % bb:
        bb -= 1
    grid = (B // bb,)

    out = pl.pallas_call(
        mhap_kernel,
        out_shape=jax.ShapeDtypeStruct((B, NH, D), jnp.float32),
        grid_spec=pltpu.PrefetchScalarGridSpec(
            num_scalar_prefetch=0,
            grid=grid,
            in_specs=[
                pl.BlockSpec((bb, D, T), lambda i: (i, 0, 0)),
                # Constant operands (index maps ignore the grid index).
                # TODO(synk): pipeline_mode=pl.Buffered(1) on these would drop
                # their second pipeline buffer and reclaim VMEM on v7x.
                pl.BlockSpec((R, D), lambda i: (0, 0)),
                pl.BlockSpec((R, 1), lambda i: (0, 0)),
                pl.BlockSpec((NH, R), lambda i: (0, 0)),
            ],
            out_specs=pl.BlockSpec((bb, NH, D), lambda i: (i, 0, 0)),
        ),
        compiler_params=pltpu.CompilerParams(
            dimension_semantics=("parallel",),
            vmem_limit_bytes=32 * 1024 * 1024,
        ),
    )(x_bdt, w1t, b1c, vbd)

    # torch.flatten(., 1): concatenate heads -> (B, NH * D).
    return out.reshape(B, NH * D)


def pooling_mhap_ref(x_nchw, w1, b1, v):
    """Pure-JAX f32 reference for correctness checking."""
    B, C, H, W = x_nchw.shape
    x = jnp.transpose(x_nchw.reshape(B, C, H * W), (0, 2, 1))     # (B, T, D)
    h = jnp.tanh(jnp.einsum("btd,hdr->bhtr", x, w1) + b1[None, :, None, :])
    s = jnp.einsum("bhtr,hr->bht", h, v)                          # (B, NH, T)
    a = jax.nn.softmax(s, axis=-1)
    out = jnp.einsum("bht,btd->bhd", a, x)                        # (B, NH, D)
    return out.reshape(B, -1)


if __name__ == "__main__":
    # Small stand-ins for input_dim=2048; num_head=8 as in PoolingMHAP.
    B, C, H, W = 4, 128, 4, 4       # input_dim = C = 128, T = 16
    NH, dr = 8, 16                  # 8 heads, small attention bottleneck

    key = jax.random.PRNGKey(0)
    k1, k2, k3, k4 = jax.random.split(key, 4)
    x = jax.random.normal(k1, (B, C, H, W), jnp.float32)
    w1 = jax.random.normal(k2, (NH, C, dr), jnp.float32) * 0.05   # per-head Linear(C, dr)
    b1 = jax.random.normal(k3, (NH, dr), jnp.float32) * 0.05
    v = jax.random.normal(k4, (NH, dr), jnp.float32) * 0.05       # per-head score vector

    out = jax.block_until_ready(pooling_mhap(x, w1, b1, v))
    ref = pooling_mhap_ref(x, w1, b1, v)

    assert out.shape == (B, NH * C)
    # bf16 MXU operands for the x@W matmul + approx reciprocal -> looser tolerance.
    assert jnp.allclose(out, ref, atol=2e-2, rtol=2e-2), "mismatch vs reference"
    print("KERNEL_OK")
</pallas_src>

<mosaic_0001>
module attributes {stable_mosaic.version = 11 : i64} {
  func.func @mhap_kernel(%arg0: i32, %arg1: memref<2x128x16xf32, #tpu.memory_space<vmem>>, %arg2: memref<128x128xbf16, #tpu.memory_space<vmem>>, %arg3: memref<128x1xf32, #tpu.memory_space<vmem>>, %arg4: memref<8x128xf32, #tpu.memory_space<vmem>>, %arg5: memref<2x8x128xf32, #tpu.memory_space<vmem>>) attributes {dimension_semantics = [#tpu.dimension_semantics<parallel>], iteration_bounds = array<i64: 2>, scalar_prefetch = 0 : i64, scratch_operands = 0 : i64, tpu.core_type = #tpu.core_type<tc>, window_params = [{transform_indices = @transform_0, window_bounds = array<i64: 2, 128, 16>}, {pipeline_mode = #tpu.pipeline_mode<synchronous>, transform_indices = @transform_1, window_bounds = array<i64: 128, 128>}, {pipeline_mode = #tpu.pipeline_mode<synchronous>, transform_indices = @transform_2, window_bounds = array<i64: 128, 1>}, {pipeline_mode = #tpu.pipeline_mode<synchronous>, transform_indices = @transform_3, window_bounds = array<i64: 8, 128>}, {transform_indices = @transform_4, window_bounds = array<i64: 2, 8, 128>}]} {
    %c0 = arith.constant 0 : index
    %c0_0 = arith.constant 0 : index
    %0 = vector.load %arg2[%c0, %c0_0] : memref<128x128xbf16, #tpu.memory_space<vmem>>, vector<128x128xbf16>
    %c0_1 = arith.constant 0 : index
    %c0_2 = arith.constant 0 : index
    %1 = vector.load %arg3[%c0_1, %c0_2] : memref<128x1xf32, #tpu.memory_space<vmem>>, vector<128x1xf32>
    %c0_3 = arith.constant 0 : index
    %c0_4 = arith.constant 0 : index
    %2 = vector.load %arg4[%c0_3, %c0_4] : memref<8x128xf32, #tpu.memory_space<vmem>>, vector<8x128xf32>
    %c0_i32 = arith.constant 0 : i32
    %c2_i32 = arith.constant 2 : i32
    %3 = arith.addi %c0_i32, %c2_i32 : i32
    %c1_i32 = arith.constant 1 : i32
    scf.for %arg6 = %c0_i32 to %3 step %c1_i32  : i32 {
      %c1_i32_6 = arith.constant 1 : i32
      %4 = arith.muli %arg6, %c1_i32_6 : i32
      %c0_i32_7 = arith.constant 0 : i32
      %5 = arith.addi %c0_i32_7, %4 : i32
      %6 = arith.index_cast %5 : i32 to index
      %c0_8 = arith.constant 0 : index
      %c0_9 = arith.constant 0 : index
      %7 = vector.load %arg1[%6, %c0_8, %c0_9] : memref<2x128x16xf32, #tpu.memory_space<vmem>>, vector<1x128x16xf32>
      %8 = vector.shape_cast %7 : vector<1x128x16xf32> to vector<128x16xf32>
      %9 = arith.truncf %8 : vector<128x16xf32> to vector<128x16xbf16>
      %cst = arith.constant dense<0.000000e+00> : vector<128x16xf32>
      %10 = tpu.matmul %0, %9, %cst {dimension_numbers = #tpu.dot_dimension_numbers<[1], [0], [0], [1], [0, 0, 1, 1], [], []>} : vector<128x128xbf16>, vector<128x16xbf16>, vector<128x16xf32> -> vector<128x16xf32>
      %11 = vector.broadcast %1 : vector<128x1xf32> to vector<128x16xf32>
      %12 = arith.addf %10, %11 : vector<128x16xf32>
      %13 = math.tanh %12 : vector<128x16xf32>
      %cst_10 = arith.constant dense<0.000000e+00> : vector<8x16xf32>
      %14 = tpu.matmul %2, %13, %cst_10 {dimension_numbers = #tpu.dot_dimension_numbers<[1], [0], [0], [1], [0, 0, 1, 1], [], []>} : vector<8x128xf32>, vector<128x16xf32>, vector<8x16xf32> -> vector<8x16xf32>
      %cst_11 = arith.constant dense<0xFF800000> : vector<8xf32>
      %15 = vector.multi_reduction <maximumf>, %14, %cst_11 [1] : vector<8x16xf32> to vector<8xf32>
      %16 = vector.shape_cast %15 : vector<8xf32> to vector<8x1xf32>
      %17 = vector.broadcast %16 : vector<8x1xf32> to vector<8x16xf32>
      %18 = arith.subf %14, %17 : vector<8x16xf32>
      %19 = math.exp %18 : vector<8x16xf32>
      %cst_12 = arith.constant dense<0.000000e+00> : vector<8xf32>
      %20 = vector.multi_reduction <add>, %19, %cst_12 [1] : vector<8x16xf32> to vector<8xf32>
      %21 = vector.shape_cast %20 : vector<8xf32> to vector<8x1xf32>
      %22 = tpu.reciprocal %21 {approx = true} : vector<8x1xf32> -> vector<8x1xf32>
      %23 = vector.broadcast %22 : vector<8x1xf32> to vector<8x16xf32>
      %24 = arith.mulf %19, %23 : vector<8x16xf32>
      %cst_13 = arith.constant dense<0.000000e+00> : vector<8x128xf32>
      %25 = tpu.matmul %24, %8, %cst_13 {dimension_numbers = #tpu.dot_dimension_numbers<[1], [1], [0], [0], [0, 0, 1, 0], [], []>} : vector<8x16xf32>, vector<128x16xf32>, vector<8x128xf32> -> vector<8x128xf32>
      %26 = arith.index_cast %5 : i32 to index
      %c0_14 = arith.constant 0 : index
      %c0_15 = arith.constant 0 : index
      %27 = vector.load %arg5[%26, %c0_14, %c0_15] : memref<2x8x128xf32, #tpu.memory_space<vmem>>, vector<1x8x128xf32>
      %28 = vector.shape_cast %27 : vector<1x8x128xf32> to vector<8x128xf32>
      %29 = vector.shape_cast %25 : vector<8x128xf32> to vector<1x8x128xf32>
      tpu.vector_store %arg5[%26, %c0_14, %c0_15], %29 {strides = array<i32>} : memref<2x8x128xf32, #tpu.memory_space<vmem>>, vector<1x8x128xf32>,
    }
    %c2_i32_5 = arith.constant 2 : i32
    return
  }
  func.func @transform_0(%arg0: i32) -> (i32, i32, i32) {
    %c0_i32 = arith.constant 0 : i32
    %c0_i32_0 = arith.constant 0 : i32
    %c0_i32_1 = arith.constant 0 : i32
    return %arg0, %c0_i32, %c0_i32_0 : i32, i32, i32
  }
  func.func @transform_1(%arg0: i32) -> (i32, i32) {
    %c0_i32 = arith.constant 0 : i32
    %c0_i32_0 = arith.constant 0 : i32
    %c0_i32_1 = arith.constant 0 : i32
    return %c0_i32, %c0_i32_0 : i32, i32
  }
  func.func @transform_2(%arg0: i32) -> (i32, i32) {
    %c0_i32 = arith.constant 0 : i32
    %c0_i32_0 = arith.constant 0 : i32
    %c0_i32_1 = arith.constant 0 : i32
    return %c0_i32, %c0_i32_0 : i32, i32
  }
  func.func @transform_3(%arg0: i32) -> (i32, i32) {
    %c0_i32 = arith.constant 0 : i32
    %c0_i32_0 = arith.constant 0 : i32
    %c0_i32_1 = arith.constant 0 : i32
    return %c0_i32, %c0_i32_0 : i32, i32
  }
  func.func @transform_4(%arg0: i32) -> (i32, i32, i32) {
    %c0_i32 = arith.constant 0 : i32
    %c0_i32_0 = arith.constant 0 : i32
    %c0_i32_1 = arith.constant 0 : i32
    return %arg0, %c0_i32, %c0_i32_0 : i32, i32, i32
  }
}

</mosaic_0001>

<llo_original>
// kernel: tpu_custom_call.1
$region0: #{tpu_custom_call.1}
  #allocation0 [shape = 'u32[]', space=smem, size = 0x4, offset = 0x4, fixed_abs, tag = 'smem constant byte address 0x4 - core index']
  #allocation1 [shape = 'u32[72,128]{1,0:T(1,128)}', space=vmem, size = 0x9000, scoped, tag = 'internal scratch']
  %s0 = inlined_call_operand.vmem [shape: f32[4,128,16], index: 0, kind: input, shape index: {}]
  %s1 = inlined_call_operand.vmem [shape: bf16[128,128], index: 1, kind: input, shape index: {}]
  %s2 = inlined_call_operand.vmem [shape: f32[128,1], index: 2, kind: input, shape index: {}]
  %s3 = inlined_call_operand.vmem [shape: f32[8,128], index: 3, kind: input, shape index: {}]
  %s4 = inlined_call_operand.hbm [shape: f32[4,8,128], index: 4, kind: output, shape index: {}]
  %s5 = sld [smem:[#allocation0]]
  $region56: #{tpu_custom_call.1} parent=0
    _
  %s7 = ssub.s32 1, %s5
  %s8 = scalar_select 0, %s7, %s5
  $region1: #{tpu_custom_call.1} parent=0
    #allocation2 [shape = 'u8[16384]{0}', space=vmem, size = 0x4000, scoped, tag = 'output window, operand 0']
    #allocation3 [shape = 's32[2]{0}', space=sflag, size = 0x8, scoped, tag = 'scoped memory for tpu_custom_call.1']
    %9 = vsyncpa [#allocation3], 0
    %s10 = scalar_lea.sflag [#allocation3], 1
    %11 = vsyncpa %s10, 0
    loop: start=0, step=1, limit=4
    $region2: #{tpu_custom_call.1} parent=1 // loop_pre_header
      _
    $region3: #{tpu_custom_call.1} parent=1 // loop_header
      %s13 = sphi 0, %s17
      %p14 = scmp.ge.s32.totalorder %s13, 4
      %s23 = sphi 0, %s25
      %s26 = sphi 0, %s23
      %s27 = sphi 0, %s26
      %s43 = sphi 0, %s27
      %s47 = sphi 0, %s47
      %s49 = sphi 0, %s47
      %s50 = sphi 0, %s49
      %s64 = sphi 0, %s50
      %s68 = sphi 0, %s68
      %s70 = sphi 0, %s68
      %s71 = sphi 0, %s70
      %s85 = sphi 0, %s71
      %s89 = sphi 0, %s89
      %s91 = sphi 0, %s89
      %s92 = sphi 0, %s91
      %s106 = sphi 0, %s92
      %s112 = sphi 0, %s114
      %s115 = sphi 0, %s112
      %s116 = sphi 0, %s115
      %s132 = sphi 0, %s116
    $region4: #{tpu_custom_call.1} parent=1 // loop_header_branch
      %16 = sbr.rel (%p14) target = $region8
    $region5: #{tpu_custom_call.1} parent=1 // loop_body
      %s18 = ssub.s32 %s13, 1
      %s19 = ssub.s32 %s13, 2
      %s20 = sadd.s32 %s13, 1
      %s21 = ssub.s32 %s13, %s20
      %p22 = scmp.eq.s32.totalorder %s21, 0
      %s24 = sadd.s32 %s23, 1
      %s25 = scalar_select %p22, %s23, %s24
      %p28 = pneg %p22
      %p29 = scmp.eq.s32.totalorder %s13, 1
      %p30 = por %p28, %p29
      %p31 = scmp.ne.s32.totalorder %s23, %s26
      %p32 = scmp.eq.s32.totalorder %s13, 0
      %p33 = por %p31, %p32
      %p34 = scmp.ne.s32.totalorder %s23, %s26
      %p35 = scmp.eq.s32.totalorder %s18, 1
      %p36 = por %p34, %p35
      %p37 = scmp.ne.s32.totalorder %s26, %s27
      %p38 = scmp.eq.s32.totalorder %s18, 0
      %p39 = por %p37, %p38
      %p40 = scmp.ne.s32.totalorder %s26, %s27
      %p41 = scmp.eq.s32.totalorder %s19, 1
      %p42 = por %p40, %p41
      %p44 = scmp.ne.s32.totalorder %s27, %s43
      %p45 = scmp.eq.s32.totalorder %s19, 0
      %p46 = por %p44, %p45
      %s48 = sadd.s32 %s47, 1
      %p51 = scmp.eq.s32.totalorder %s13, 1
      %p52 = scmp.ne.s32.totalorder %s47, %s49
      %p53 = scmp.eq.s32.totalorder %s13, 0
      %p54 = por %p52, %p53
      %p55 = scmp.ne.s32.totalorder %s47, %s49
      %p56 = scmp.eq.s32.totalorder %s18, 1
      %p57 = por %p55, %p56
      %p58 = scmp.ne.s32.totalorder %s49, %s50
      %p59 = scmp.eq.s32.totalorder %s18, 0
      %p60 = por %p58, %p59
      %p61 = scmp.ne.s32.totalorder %s49, %s50
      %p62 = scmp.eq.s32.totalorder %s19, 1
      %p63 = por %p61, %p62
      %p65 = scmp.ne.s32.totalorder %s50, %s64
      %p66 = scmp.eq.s32.totalorder %s19, 0
      %p67 = por %p65, %p66
      %s69 = sadd.s32 %s68, 1
      %p72 = scmp.eq.s32.totalorder %s13, 1
      %p73 = scmp.ne.s32.totalorder %s68, %s70
      %p74 = scmp.eq.s32.totalorder %s13, 0
      %p75 = por %p73, %p74
      %p76 = scmp.ne.s32.totalorder %s68, %s70
      %p77 = scmp.eq.s32.totalorder %s18, 1
      %p78 = por %p76, %p77
      %p79 = scmp.ne.s32.totalorder %s70, %s71
      %p80 = scmp.eq.s32.totalorder %s18, 0
      %p81 = por %p79, %p80
      %p82 = scmp.ne.s32.totalorder %s70, %s71
      %p83 = scmp.eq.s32.totalorder %s19, 1
      %p84 = por %p82, %p83
      %p86 = scmp.ne.s32.totalorder %s71, %s85
      %p87 = scmp.eq.s32.totalorder %s19, 0
      %p88 = por %p86, %p87
      %s90 = sadd.s32 %s89, 1
      %p93 = scmp.eq.s32.totalorder %s13, 1
      %p94 = scmp.ne.s32.totalorder %s89, %s91
      %p95 = scmp.eq.s32.totalorder %s13, 0
      %p96 = por %p94, %p95
      %p97 = scmp.ne.s32.totalorder %s89, %s91
      %p98 = scmp.eq.s32.totalorder %s18, 1
      %p99 = por %p97, %p98
      %p100 = scmp.ne.s32.totalorder %s91, %s92
      %p101 = scmp.eq.s32.totalorder %s18, 0
      %p102 = por %p100, %p101
      %p103 = scmp.ne.s32.totalorder %s91, %s92
      %p104 = scmp.eq.s32.totalorder %s19, 1
      %p105 = por %p103, %p104
      %p107 = scmp.ne.s32.totalorder %s92, %s106
      %p108 = scmp.eq.s32.totalorder %s19, 0
      %p109 = por %p107, %p108
      %s110 = ssub.s32 %s13, %s20
      %p111 = scmp.eq.s32.totalorder %s110, 0
      %s113 = sadd.s32 %s112, 1
      %s114 = scalar_select %p111, %s112, %s113
      %p117 = pneg %p111
      %p118 = scmp.eq.s32.totalorder %s13, 1
      %p119 = por %p117, %p118
      %p120 = scmp.ne.s32.totalorder %s112, %s115
      %p121 = scmp.eq.s32.totalorder %s13, 0
      %p122 = por %p120, %p121
      %p123 = scmp.ne.s32.totalorder %s112, %s115
      %p124 = scmp.eq.s32.totalorder %s18, 1
      %p125 = por %p123, %p124
      %p126 = scmp.ne.s32.totalorder %s115, %s116
      %p127 = scmp.eq.s32.totalorder %s18, 0
      %p128 = por %p126, %p127
      %p129 = scmp.ne.s32.totalorder %s115, %s116
      %p130 = scmp.eq.s32.totalorder %s19, 1
      %p131 = por %p129, %p130
      %p133 = scmp.ne.s32.totalorder %s116, %s132
      %p134 = scmp.eq.s32.totalorder %s19, 0
      %p135 = por %p133, %p134
      %p136 = scmp.le.s32.totalorder 1, %s13
      %p137 = scmp.lt.s32.totalorder %s13, 3
      %p138 = pnand %p136, %p137
      %p139 = pneg %p138
      // Predicated region
      $region9: #{tpu_custom_call.1} parent=5 // pred_check
        _
      $region10: #{tpu_custom_call.1} parent=5 // pred_check_branch
        %141 = sbr.rel (%p138) target = $region12
      $region11: #{tpu_custom_call.1} parent=5 // pred_region
        %s142 = ssub.s32 %s13, 1
        // Predicated region
        $region13: #{tpu_custom_call.1} parent=11 // pred_check
          %p143 = pneg %p60
        $region14: #{tpu_custom_call.1} parent=11 // pred_check_branch
          %145 = sbr.rel (%p143) target = $region16
        $region15: #{tpu_custom_call.1} parent=11 // pred_region
          _
        $region16: #{tpu_custom_call.1} parent=11 // pred_fallthru
          _
        // Predicated region
        $region17: #{tpu_custom_call.1} parent=11 // pred_check
          %p146 = pneg %p81
        $region18: #{tpu_custom_call.1} parent=11 // pred_check_branch
          %148 = sbr.rel (%p146) target = $region20
        $region19: #{tpu_custom_call.1} parent=11 // pred_region
          _
        $region20: #{tpu_custom_call.1} parent=11 // pred_fallthru
          _
        // Predicated region
        $region21: #{tpu_custom_call.1} parent=11 // pred_check
          %p149 = pneg %p102
        $region22: #{tpu_custom_call.1} parent=11 // pred_check_branch
          %151 = sbr.rel (%p149) target = $region24
        $region23: #{tpu_custom_call.1} parent=11 // pred_region
          _
        $region24: #{tpu_custom_call.1} parent=11 // pred_fallthru
          _
      $region12: #{tpu_custom_call.1} parent=5 // pred_fallthru
        _
      %p152 = scmp.lt.s32.totalorder %s13, 2
      // Predicated region
      $region25: #{tpu_custom_call.1} parent=5 // pred_check
        %p153 = pneg %p152
      $region26: #{tpu_custom_call.1} parent=5 // pred_check_branch
        %155 = sbr.rel (%p153) target = $region28
      $region27: #{tpu_custom_call.1} parent=5 // pred_region
        // Predicated region
        $region29: #{tpu_custom_call.1} parent=27 // pred_check
          %p156 = pneg %p33
        $region30: #{tpu_custom_call.1} parent=27 // pred_check_branch
          %158 = sbr.rel (%p156) target = $region32
        $region31: #{tpu_custom_call.1} parent=27 // pred_region
          %s159 = smul.u32 2, %s13
          %p160 = scmp.lt.s32.totalorder %s159, 3
          %s161 = scalar_select %p160, %s159, 3
          %s162 = smul.addr %s161, 16
          %s163 = smul.addr %s162, 8
          %s164 = scalar_lea.vmem %s0, %s163
          %s165 = smul.u32 2, %s13
        $region32: #{tpu_custom_call.1} parent=27 // pred_fallthru
          _
      $region28: #{tpu_custom_call.1} parent=5 // pred_fallthru
        _
      %p166 = scmp.le.s32.totalorder 1, %s13
      %p167 = scmp.lt.s32.totalorder %s13, 3
      %p168 = pnand %p166, %p167
      %p169 = pneg %p168
      // Predicated region
      $region33: #{tpu_custom_call.1} parent=5 // pred_check
        _
      $region34: #{tpu_custom_call.1} parent=5 // pred_check_branch
        %171 = sbr.rel (%p168) target = $region36
      $region35: #{tpu_custom_call.1} parent=5 // pred_region
        %s172 = ssub.s32 %s13, 1
        %s173 = smul.u32 2, %s18
        %p174 = scmp.lt.s32.totalorder %s173, 3
        %s175 = scalar_select %p174, %s173, 3
        %s176 = smul.addr %s175, 16
        %s177 = smul.addr %s176, 8
        %s178 = scalar_lea.vmem %s0, %s177
        %p179 = pneg %p39
        %p180 = pneg %p36
        %p181 = pneg %p60
        %p182 = pneg %p57
        %p183 = pneg %p81
        %p184 = pneg %p78
        %p185 = pneg %p102
        %p186 = pneg %p99
        %p187 = pneg %p128
        %p188 = pneg %p125
        %s189 = sand.u32 %s115, 1
        %s190 = scalar_lea.sflag [#allocation3], %s189
        %s191 = sand.u32 %s115, 1
        %s192 = smul.addr %s191, 16
        %s193 = scalar_lea.vmem [#allocation2], %s192
        %s194 = smul.u32 2, %s18
        %p195 = scmp.lt.s32.totalorder %s194, 3
        %s196 = scalar_select %p195, %s194, 3
        %s197 = smul.addr %s196, 16
        %s198 = smul.addr %s197, 8
        %s199 = scalar_lea.vmem %s0, %s198
        %s200 = smul.u32 2, %s18
        %s201 = smul.u32 2, %s18
        %v202 = vld [vmem:[%s1] sm:$0xf]
        %v203 = vld [vmem:[%s1 + $0x4] sm:$0xf]
        %v204 = vld [vmem:[%s1 + $0x8] sm:$0xf]
        %v205 = vld [vmem:[%s1 + $0xc] sm:$0xf]
        %v206 = vld [vmem:[%s1 + $0x10] sm:$0xf]
        %v207 = vld [vmem:[%s1 + $0x14] sm:$0xf]
        %v208 = vld [vmem:[%s1 + $0x18] sm:$0xf]
        %v209 = vld [vmem:[%s1 + $0x1c] sm:$0xf]
        %v210 = vld [vmem:[%s1 + $0x20] sm:$0xf]
        %v211 = vld [vmem:[%s1 + $0x24] sm:$0xf]
        %v212 = vld [vmem:[%s1 + $0x28] sm:$0xf]
        %v213 = vld [vmem:[%s1 + $0x2c] sm:$0xf]
        %v214 = vld [vmem:[%s1 + $0x30] sm:$0xf]
        %v215 = vld [vmem:[%s1 + $0x34] sm:$0xf]
        %v216 = vld [vmem:[%s1 + $0x38] sm:$0xf]
        %v217 = vld [vmem:[%s1 + $0x3c] sm:$0xf]
        %v218 = vld [vmem:[%s2] sm:$0xff]
        %v219 = vld [vmem:[%s2 + $0x8] sm:$0xff]
        %v220 = vld [vmem:[%s2 + $0x10] sm:$0xff]
        %v221 = vld [vmem:[%s2 + $0x18] sm:$0xff]
        %v222 = vld [vmem:[%s2 + $0x20] sm:$0xff]
        %v223 = vld [vmem:[%s2 + $0x28] sm:$0xff]
        %v224 = vld [vmem:[%s2 + $0x30] sm:$0xff]
        %v225 = vld [vmem:[%s2 + $0x38] sm:$0xff]
        %v226 = vld [vmem:[%s2 + $0x40] sm:$0xff]
        %v227 = vld [vmem:[%s2 + $0x48] sm:$0xff]
        %v228 = vld [vmem:[%s2 + $0x50] sm:$0xff]
        %v229 = vld [vmem:[%s2 + $0x58] sm:$0xff]
        %v230 = vld [vmem:[%s2 + $0x60] sm:$0xff]
        %v231 = vld [vmem:[%s2 + $0x68] sm:$0xff]
        %v232 = vld [vmem:[%s2 + $0x70] sm:$0xff]
        %v233 = vld [vmem:[%s2 + $0x78] sm:$0xff]
        %v234 = vld [vmem:[%s3] sm:$0xff]
        loop: start=0, step=1, limit=2
        $region37: #{tpu_custom_call.1} parent=35 // loop_pre_header
          _
        $region38: #{tpu_custom_call.1} parent=35 // loop_header
          %s236 = sphi 0, %s240
          %p237 = scmp.ge.s32.totalorder %s236, 2
        $region39: #{tpu_custom_call.1} parent=35 // loop_header_branch
          %239 = sbr.rel (%p237) target = $region43
        $region40: #{tpu_custom_call.1} parent=35 // loop_body
          %s241 = smul.u32 %s236, 128
          %s242 = scalar_lea.vmem %s199, %s241
          %v243 = vld [vmem:[%s242] sm:$0xff]
          %v244 = vld [vmem:[%s242 + $0x8] sm:$0xff]
          %v245 = vld [vmem:[%s242 + $0x10] sm:$0xff]
          %v246 = vld [vmem:[%s242 + $0x18] sm:$0xff]
          %v247 = vld [vmem:[%s242 + $0x20] sm:$0xff]
          %v248 = vld [vmem:[%s242 + $0x28] sm:$0xff]
          %v249 = vld [vmem:[%s242 + $0x30] sm:$0xff]
          %v250 = vld [vmem:[%s242 + $0x38] sm:$0xff]
          %v251 = vld [vmem:[%s242 + $0x40] sm:$0xff]
          %v252 = vld [vmem:[%s242 + $0x48] sm:$0xff]
          %v253 = vld [vmem:[%s242 + $0x50] sm:$0xff]
          %v254 = vld [vmem:[%s242 + $0x58] sm:$0xff]
          %v255 = vld [vmem:[%s242 + $0x60] sm:$0xff]
          %v256 = vld [vmem:[%s242 + $0x68] sm:$0xff]
          %v257 = vld [vmem:[%s242 + $0x70] sm:$0xff]
          %v258 = vld [vmem:[%s242 + $0x78] sm:$0xff]
          %v259 = vpack.c.bf16 %v244, %v243
          %v260 = vpack.c.bf16 %v246, %v245
          %v261 = vpack.c.bf16 %v248, %v247
          %v262 = vpack.c.bf16 %v250, %v249
          %v263 = vpack.c.bf16 %v252, %v251
          %v264 = vpack.c.bf16 %v254, %v253
          %v265 = vpack.c.bf16 %v256, %v255
          %v266 = vpack.c.bf16 %v258, %v257
          %268 = vset.pattern.permute.xlu0 0
          %269 = vperm.xlu0 %268, %v218
          %v270 = vpop.permute.xlu0 %269
          %273 = vset.pattern.permute.xlu0 0
          %274 = vperm.xlu0 %273, %v219
          %v275 = vpop.permute.xlu0 %274
          %278 = vset.pattern.permute.xlu0 0
          %279 = vperm.xlu0 %278, %v220
          %v280 = vpop.permute.xlu0 %279
          %283 = vset.pattern.permute.xlu0 0
          %284 = vperm.xlu0 %283, %v221
          %v285 = vpop.permute.xlu0 %284
          %288 = vset.pattern.permute.xlu0 0
          %289 = vperm.xlu0 %288, %v222
          %v290 = vpop.permute.xlu0 %289
          %293 = vset.pattern.permute.xlu0 0
          %294 = vperm.xlu0 %293, %v223
          %v295 = vpop.permute.xlu0 %294
          %298 = vset.pattern.permute.xlu0 0
          %299 = vperm.xlu0 %298, %v224
          %v300 = vpop.permute.xlu0 %299
          %303 = vset.pattern.permute.xlu0 0
          %304 = vperm.xlu0 %303, %v225
          %v305 = vpop.permute.xlu0 %304
          %308 = vset.pattern.permute.xlu0 0
          %309 = vperm.xlu0 %308, %v226
          %v310 = vpop.permute.xlu0 %309
          %313 = vset.pattern.permute.xlu0 0
          %314 = vperm.xlu0 %313, %v227
          %v315 = vpop.permute.xlu0 %314
          %318 = vset.pattern.permute.xlu0 0
          %319 = vperm.xlu0 %318, %v228
          %v320 = vpop.permute.xlu0 %319
          %323 = vset.pattern.permute.xlu0 0
          %324 = vperm.xlu0 %323, %v229
          %v325 = vpop.permute.xlu0 %324
          %328 = vset.pattern.permute.xlu0 0
          %329 = vperm.xlu0 %328, %v230
          %v330 = vpop.permute.xlu0 %329
          %333 = vset.pattern.permute.xlu0 0
          %334 = vperm.xlu0 %333, %v231
          %v335 = vpop.permute.xlu0 %334
          %338 = vset.pattern.permute.xlu0 0
          %339 = vperm.xlu0 %338, %v232
          %v340 = vpop.permute.xlu0 %339
          %343 = vset.pattern.permute.xlu0 0
          %344 = vperm.xlu0 %343, %v233
          %v345 = vpop.permute.xlu0 %344
          %v363 = vunpack.c.l.b16 %v202
          %v364 = vunpack.c.l.b16 %v203
          %v365 = vunpack.c.l.b16 %v204
          %v366 = vunpack.c.l.b16 %v205
          %v367 = vunpack.c.l.b16 %v206
          %v368 = vunpack.c.l.b16 %v207
          %v369 = vunpack.c.l.b16 %v208
          %v370 = vunpack.c.l.b16 %v209
          %v371 = vunpack.c.l.b16 %v210
          %v372 = vunpack.c.l.b16 %v211
          %v373 = vunpack.c.l.b16 %v212
          %v374 = vunpack.c.l.b16 %v213
          %v375 = vunpack.c.l.b16 %v214
          %v376 = vunpack.c.l.b16 %v215
          %v377 = vunpack.c.l.b16 %v216
          %v378 = vunpack.c.l.b16 %v217
          %v379 = vpack.c.b16 %v364, %v363
          %v380 = vpack.c.b16 %v366, %v365
          %v381 = vpack.c.b16 %v368, %v367
          %v382 = vpack.c.b16 %v370, %v369
          %v383 = vpack.c.b16 %v372, %v371
          %v384 = vpack.c.b16 %v374, %v373
          %v385 = vpack.c.b16 %v376, %v375
          %v386 = vpack.c.b16 %v378, %v377
          %395 = vmatpush.bf16.msra.mxu0 %v266
          %396 = vmatpush.bf16.msra.mxu0 %v265
          %397 = vmatpush.bf16.msra.mxu0 %v264
          %398 = vmatpush.bf16.msra.mxu0 %v263
          %399 = vmatpush.bf16.msra.mxu0 %v262
          %400 = vmatpush.bf16.msra.mxu0 %v261
          %401 = vmatpush.bf16.msra.mxu0 %v260
          %402 = vmatpush.bf16.msra.mxu0 %v259
          %403 = vmatmul.bf16.gmra.mxu0 %v379
          %v404 = vpop.f32.mrf.mxu0
          %v405 = vadd.f32 %v270, %v404
          %v406 = vpop.f32.mrf.mxu0
          %v407 = vadd.f32 %v275, %v406
          %408 = vmatmul.bf16.gmra.mxu0 %v380
          %v409 = vpop.f32.mrf.mxu0
          %v410 = vadd.f32 %v280, %v409
          %v411 = vpop.f32.mrf.mxu0
          %v412 = vadd.f32 %v285, %v411
          %413 = vmatmul.bf16.gmra.mxu0 %v381
          %v414 = vpop.f32.mrf.mxu0
          %v415 = vadd.f32 %v290, %v414
          %v416 = vpop.f32.mrf.mxu0
          %v417 = vadd.f32 %v295, %v416
          %418 = vmatmul.bf16.gmra.mxu0 %v382
          %v419 = vpop.f32.mrf.mxu0
          %v420 = vadd.f32 %v300, %v419
          %v421 = vpop.f32.mrf.mxu0
          %v422 = vadd.f32 %v305, %v421
          %423 = vmatmul.bf16.gmra.mxu0 %v383
          %v424 = vpop.f32.mrf.mxu0
          %v425 = vadd.f32 %v310, %v424
          %v426 = vpop.f32.mrf.mxu0
          %v427 = vadd.f32 %v315, %v426
          %428 = vmatmul.bf16.gmra.mxu0 %v384
          %v429 = vpop.f32.mrf.mxu0
          %v430 = vadd.f32 %v320, %v429
          %v431 = vpop.f32.mrf.mxu0
          %v432 = vadd.f32 %v325, %v431
          %433 = vmatmul.bf16.gmra.mxu0 %v385
          %v434 = vpop.f32.mrf.mxu0
          %v435 = vadd.f32 %v330, %v434
          %v436 = vpop.f32.mrf.mxu0
          %v437 = vadd.f32 %v335, %v436
          %438 = vmatmul.bf16.gmra.mxu0 %v386
          %v439 = vpop.f32.mrf.mxu0
          %v440 = vadd.f32 %v340, %v439
          %v441 = vpop.f32.mrf.mxu0
          %v442 = vadd.f32 %v345, %v441
          %443 = vdwg.mxu0
          %v444 = vtanh.pop %v405
          %v445 = vtanh.pop %v407
          %v446 = vtanh.pop %v410
          %v447 = vtanh.pop %v412
          %v448 = vtanh.pop %v415
          %v449 = vtanh.pop %v417
          %v450 = vtanh.pop %v420
          %v451 = vtanh.pop %v422
          %v452 = vtanh.pop %v425
          %v453 = vtanh.pop %v427
          %v454 = vtanh.pop %v430
          %v455 = vtanh.pop %v432
          %v456 = vtanh.pop %v435
          %v457 = vtanh.pop %v437
          %v458 = vtanh.pop %v440
          %v459 = vtanh.pop %v442
          %460 = vmatpush.msra.mxu0 %v459
          %461 = vmatpush.msra.mxu0 %v458
          %462 = vmatpush.msra.mxu0 %v457
          %463 = vmatpush.msra.mxu0 %v456
          %464 = vmatpush.msra.mxu0 %v455
          %465 = vmatpush.msra.mxu0 %v454
          %466 = vmatpush.msra.mxu0 %v453
          %467 = vmatpush.msra.mxu0 %v452
          %468 = vmatpush.msra.mxu0 %v451
          %469 = vmatpush.msra.mxu0 %v450
          %470 = vmatpush.msra.mxu0 %v449
          %471 = vmatpush.msra.mxu0 %v448
          %472 = vmatpush.msra.mxu0 %v447
          %473 = vmatpush.msra.mxu0 %v446
          %474 = vmatpush.msra.mxu0 %v445
          %475 = vmatpush.msra.mxu0 %v444
          %476 = vmatmul.f32.gmra.mxu0 %v234
          %v477 = vpop.f32.mrf.mxu0
          %v478 = vadd.f32 0.0, %v477
          %479 = vdwg.mxu0
          %vm480 = vcmask 130048
          %v481 = vsel %vm480, %v478, -inf
          %482 = vmax.xlane.f32.xlu0 %v481
          %v483 = vpop.xlane.xlu0 %482
          %v484 = vsub.f32 %v478, %v483
          %v485 = vmul.f32 %v484, 1.442695
          %v486 = vpow.pop %v485
          %v487 = vsel %vm480, %v486, 0.0
          %488 = vadd.xlane.f32.xlu0 %v487
          %v489 = vpop.xlane.xlu0 %488
          %v490 = vrcp.pop %v489
          %v491 = vmul.f32 %v486, %v490
          %v493 = vsel %vm480, %v491, 0
          %v496 = vsel %vm480, %v243, 0
          %v499 = vsel %vm480, %v244, 0
          %v502 = vsel %vm480, %v245, 0
          %v505 = vsel %vm480, %v246, 0
          %v508 = vsel %vm480, %v247, 0
          %v511 = vsel %vm480, %v248, 0
          %v514 = vsel %vm480, %v249, 0
          %v517 = vsel %vm480, %v250, 0
          %v520 = vsel %vm480, %v251, 0
          %v523 = vsel %vm480, %v252, 0
          %v526 = vsel %vm480, %v253, 0
          %v529 = vsel %vm480, %v254, 0
          %v532 = vsel %vm480, %v255, 0
          %v535 = vsel %vm480, %v256, 0
          %v538 = vsel %vm480, %v257, 0
          %v541 = vsel %vm480, %v258, 0
          %543 = vmatpush.xpose.msra.mxu0 %v541
          %544 = vmatpush.xpose.msra.mxu0 %v538
          %545 = vmatpush.xpose.msra.mxu0 %v535
          %546 = vmatpush.xpose.msra.mxu0 %v532
          %547 = vmatpush.xpose.msra.mxu0 %v529
          %548 = vmatpush.xpose.msra.mxu0 %v526
          %549 = vmatpush.xpose.msra.mxu0 %v523
          %550 = vmatpush.xpose.msra.mxu0 %v520
          %551 = vmatpush.xpose.msra.mxu0 %v517
          %552 = vmatpush.xpose.msra.mxu0 %v514
          %553 = vmatpush.xpose.msra.mxu0 %v511
          %554 = vmatpush.xpose.msra.mxu0 %v508
          %555 = vmatpush.xpose.msra.mxu0 %v505
          %556 = vmatpush.xpose.msra.mxu0 %v502
          %557 = vmatpush.xpose.msra.mxu0 %v499
          %558 = vmatpush.xpose.msra.mxu0 %v496
          %559 = vmatmul.f32.gmra.mxu0 %v493
          %v560 = vpop.f32.mrf.mxu0
          %v561 = vadd.f32 0.0, %v560
          %562 = vdwg.mxu0
          %s563 = smul.u32 %s236, 8
          %s564 = scalar_lea.vmem %s193, %s563 [#allocation2]
          %565 = vst [vmem:[%s564] sm:$0xff] %v561
        $region41: #{tpu_custom_call.1} parent=35 // loop_footer
          %s240 = sadd.s32 1, %s236
        $region42: #{tpu_custom_call.1} parent=35 // loop_footer_branch
          %235 = sbr.rel target = $region38
        $region43: #{tpu_custom_call.1} parent=35 // loop_exit
          _
        %s566 = sand.u32 %s115, 1
        %s567 = scalar_lea.sflag [#allocation3], %s566
        %s568 = sand.u32 %s115, 1
        %s569 = smul.addr %s568, 16
        %s570 = scalar_lea.vmem [#allocation2], %s569
        // Predicated region
        $region44: #{tpu_custom_call.1} parent=35 // pred_check
          %p571 = pneg %p125
        $region45: #{tpu_custom_call.1} parent=35 // pred_check_branch
          %573 = sbr.rel (%p571) target = $region47
        $region46: #{tpu_custom_call.1} parent=35 // pred_region
          %s574 = smul.u32 2, %s18
          %576 = vsyncadd %s567, 0
          %s577 = smul.addr %s574, 8
          %s578 = scalar_lea.hbm %s4, %s577
          %s579 = sshll.u32 %s570, 4
          %s580 = int_to_ptr.vmem [resolvable:$true] %s579
          %s581 = sshll.u32 %s578, 4
          %s582 = int_to_ptr.hbm [resolvable:$true] %s581
          %587 = dma.vmem_to_hbm [thread:$0]  %s580, 256, %s582, %s567, 128, 128, 8
        $region47: #{tpu_custom_call.1} parent=35 // pred_fallthru
          _
      $region36: #{tpu_custom_call.1} parent=5 // pred_fallthru
        _
      %p588 = scmp.le.s32.totalorder 2, %s13
      // Predicated region
      $region48: #{tpu_custom_call.1} parent=5 // pred_check
        %p589 = pneg %p588
      $region49: #{tpu_custom_call.1} parent=5 // pred_check_branch
        %591 = sbr.rel (%p589) target = $region51
      $region50: #{tpu_custom_call.1} parent=5 // pred_region
        %s592 = ssub.s32 %s13, 2
        // Predicated region
        $region52: #{tpu_custom_call.1} parent=50 // pred_check
          %p593 = pneg %p131
        $region53: #{tpu_custom_call.1} parent=50 // pred_check_branch
          %595 = sbr.rel (%p593) target = $region55
        $region54: #{tpu_custom_call.1} parent=50 // pred_region
          %s596 = sand.u32 %s116, 1
          %s597 = scalar_lea.sflag [#allocation3], %s596
          %s598 = sand.u32 %s116, 1
          %s599 = smul.addr %s598, 16
          %s600 = scalar_lea.vmem [#allocation2], %s599
          %602 = dma.done %s597, 256
        $region55: #{tpu_custom_call.1} parent=50 // pred_fallthru
          _
      $region51: #{tpu_custom_call.1} parent=5 // pred_fallthru
        _
    $region6: #{tpu_custom_call.1} parent=1 // loop_footer
      %s17 = sadd.s32 1, %s13
    $region7: #{tpu_custom_call.1} parent=1 // loop_footer_branch
      %12 = sbr.rel target = $region3
    $region8: #{tpu_custom_call.1} parent=1 // loop_exit
      _
    %603 = vsyncpa [#allocation3], 1
    %s604 = scalar_lea.sflag [#allocation3], 1
    %605 = vsyncpa %s604, 1

</llo_original>
